<compile_context>
chip_gen: v6e
topology: v6e:2x2x1
jax: 0.10.0
libtpu: 0.0.40
codegen_flags: <defaults>
</compile_context>

<pallas_src>
import functools
import math

import jax
import jax.numpy as jnp
from jax import lax
from jax.experimental import pallas as pl
from jax.experimental.pallas import tpu as pltpu


def make_pose_table(max_len: int, dim_model: int) -> jnp.ndarray:
    """Deterministic sinusoidal table, identical to the PyTorch __init__."""
    position = jnp.arange(max_len, dtype=jnp.float32)[:, None]              # (L, 1)
    div_term = jnp.exp(
        jnp.arange(0, dim_model, 2, dtype=jnp.float32)
        * -(math.log(10000.0) / dim_model)
    )                                                                       # (D/2,)
    pose = jnp.zeros((max_len, dim_model), dtype=jnp.float32)
    pose = pose.at[:, 0::2].set(jnp.sin(position * div_term))
    pose = pose.at[:, 1::2].set(jnp.cos(position * div_term))
    return pose


def _pick_tile(n: int, target: int, quantum: int) -> int:
    """Largest divisor of n that is a multiple of `quantum` and <= target.

    Falls back to the full extent n (always a legal block dim)."""
    if n <= target:
        return n
    t = (target // quantum) * quantum
    while t >= quantum:
        if n % t == 0:
            return t
        t -= quantum
    return n


def _pe_kernel(seed_ref, x_ref, pose_ref, o_ref, *, p: float, td_total: int):
    # x_ref:    (tB, tC) lane-dense tile of the flattened (B, T*D) feature.
    # pose_ref: (1, tC)  matching slice of the flattened positional table.
    y = x_ref[...].astype(jnp.float32) + pose_ref[...]   # broadcast over rows

    if p > 0.0:
        tb, tc = x_ref.shape
        i = pl.program_id(0)
        j = pl.program_id(1)
        # Global element index (unique per element, independent of tiling).
        rows = (lax.broadcasted_iota(jnp.int32, (tb, tc), 0) + i * tb).astype(jnp.uint32)
        cols = (lax.broadcasted_iota(jnp.int32, (tb, tc), 1) + j * tc).astype(jnp.uint32)
        idx = rows * jnp.uint32(td_total) + cols

        # Stateless counter hash (lowbias32 mix), seeded from the SMEM scalar.
        seed = seed_ref[0].astype(jnp.uint32)
        h = idx ^ (seed * jnp.uint32(0x9E3779B9))
        h = h ^ (h >> 16)
        h = h * jnp.uint32(0x7FEB352D)
        h = h ^ (h >> 15)
        h = h * jnp.uint32(0x846CA68B)
        h = h ^ (h >> 16)

        # Integer threshold compare: keep iff uniform >= p  <=>  bits >= p*2^32.
        thresh = jnp.uint32(min(int(round(p * float(1 << 32))), (1 << 32) - 1))
        keep = h >= thresh
        scale = jnp.float32(1.0 / (1.0 - p))
        y = jnp.where(keep, y * scale, jnp.zeros_like(y))

    o_ref[...] = y.astype(o_ref.dtype)


def positional_encoding(feature: jnp.ndarray,
                        pose: jnp.ndarray,
                        *,
                        dropout_p: float = 0.0,
                        seed: int = 0) -> jnp.ndarray:
    """feature: [B, T, D]; pose: [max_len, D] float32 sinusoidal table."""
    B, T, D = feature.shape
    max_len = pose.shape[0]
    assert T <= max_len, f"sequence length {T} exceeds positional table max_len {max_len}"

    TD = T * D
    # Lane-dense presentation: flatten (T, D) -> T*D so the kernel's last dim
    # is wide. The reshape is contiguous => free (layout plumbing only).
    x2 = feature.reshape(B, TD)
    pose2 = pose[:T, :].reshape(1, TD).astype(jnp.float32)

    # Tile sizes: divide exactly, keep per-block VMEM small
    # (256 rows x 2048 cols x 4 B = 2 MiB per buffer; in + out + pose,
    #  double-buffered, stays well under every chip's scoped VMEM default).
    tB = _pick_tile(B, 256, 8)
    tC = _pick_tile(TD, 2048, 128)
    grid = (B // tB, TD // tC)

    kernel = functools.partial(_pe_kernel, p=float(dropout_p), td_total=TD)

    out2 = pl.pallas_call(
        kernel,
        out_shape=jax.ShapeDtypeStruct((B, TD), feature.dtype),
        grid_spec=pltpu.PrefetchScalarGridSpec(
            num_scalar_prefetch=1,
            grid=grid,
            in_specs=[
                pl.BlockSpec((tB, tC), lambda i, j, seed_ref: (i, j)),
                pl.BlockSpec((1, tC), lambda i, j, seed_ref: (0, j)),
            ],
            out_specs=pl.BlockSpec((tB, tC), lambda i, j, seed_ref: (i, j)),
        ),
        compiler_params=pltpu.CompilerParams(
            # Stateless per-element dropout hash => grid order doesn't matter,
            # so both axes can shard across TensorCores (megacore friendly).
            dimension_semantics=("parallel", "parallel"),
        ),
    )(jnp.asarray([seed], dtype=jnp.int32), x2, pose2)

    return out2.reshape(B, T, D)


if __name__ == "__main__":
    # Small shapes consistent with the module: batch=2, seq=8, hidden=32.
    B, T, D = 2, 8, 32
    MAX_LEN = 64
    DROPOUT_P = 0.1

    key = jax.random.PRNGKey(0)
    feature = jax.random.normal(key, (B, T, D), dtype=jnp.float32)
    pose = make_pose_table(MAX_LEN, D)

    ref = feature + pose[None, :T, :]

    # 1) Deterministic check (eval-mode forward: dropout disabled).
    out_eval = jax.block_until_ready(positional_encoding(feature, pose, dropout_p=0.0))
    assert out_eval.shape == (B, T, D)
    assert jnp.allclose(out_eval, ref, atol=1e-6, rtol=1e-6), "mismatch vs reference"

    # 2) Training-mode forward with in-kernel dropout (stochastic mask).
    #    Every output element must be either 0 (dropped) or ref/(1-p) (kept).
    out_train = jax.block_until_ready(
        positional_encoding(feature, pose, dropout_p=DROPOUT_P, seed=1234))
    assert out_train.shape == (B, T, D)
    scale = 1.0 / (1.0 - DROPOUT_P)
    is_zero = jnp.isclose(out_train, 0.0, atol=1e-6)
    is_scaled = jnp.isclose(out_train, ref * scale, atol=1e-5, rtol=1e-5)
    assert bool(jnp.all(is_zero | is_scaled)), "dropout output not in {0, ref/(1-p)}"

    print("KERNEL_OK")
</pallas_src>

<mosaic_0001>
module attributes {stable_mosaic.version = 11 : i64} {
  func.func @_pe_kernel(%arg0: i32, %arg1: i32, %arg2: memref<1xi32, #tpu.memory_space<smem>>, %arg3: memref<2x256xf32, #tpu.memory_space<vmem>>, %arg4: memref<1x256xf32, #tpu.memory_space<vmem>>, %arg5: memref<2x256xf32, #tpu.memory_space<vmem>>) attributes {dimension_semantics = [#tpu.dimension_semantics<parallel>, #tpu.dimension_semantics<parallel>], iteration_bounds = array<i64: 1, 1>, scalar_prefetch = 1 : i64, scratch_operands = 0 : i64, tpu.core_type = #tpu.core_type<tc>, window_params = [{transform_indices = @transform_0, window_bounds = array<i64: 2, 256>}, {transform_indices = @transform_1, window_bounds = array<i64: 1, 256>}, {transform_indices = @transform_2, window_bounds = array<i64: 2, 256>}]} {
    %c0 = arith.constant 0 : index
    %c0_0 = arith.constant 0 : index
    %0 = vector.load %arg3[%c0, %c0_0] : memref<2x256xf32, #tpu.memory_space<vmem>>, vector<2x256xf32>
    %c0_1 = arith.constant 0 : index
    %c0_2 = arith.constant 0 : index
    %1 = vector.load %arg4[%c0_1, %c0_2] : memref<1x256xf32, #tpu.memory_space<vmem>>, vector<1x256xf32>
    %2 = vector.broadcast %1 : vector<1x256xf32> to vector<2x256xf32>
    %3 = arith.addf %0, %2 : vector<2x256xf32>
    %c0_3 = arith.constant 0 : index
    %c0_4 = arith.constant 0 : index
    %4 = vector.load %arg5[%c0_3, %c0_4] : memref<2x256xf32, #tpu.memory_space<vmem>>, vector<2x256xf32>
    tpu.vector_store %arg5[%c0_3, %c0_4], %3 {strides = array<i32>} : memref<2x256xf32, #tpu.memory_space<vmem>>, vector<2x256xf32>,
    return
  }
  func.func @transform_0(%arg0: i32, %arg1: i32, %arg2: memref<1xi32, #tpu.memory_space<smem>>) -> (i32, i32) {
    %c0_i32 = arith.constant 0 : i32
    return %arg0, %arg1 : i32, i32
  }
  func.func @transform_1(%arg0: i32, %arg1: i32, %arg2: memref<1xi32, #tpu.memory_space<smem>>) -> (i32, i32) {
    %c0_i32 = arith.constant 0 : i32
    %c0_i32_0 = arith.constant 0 : i32
    return %c0_i32, %arg1 : i32, i32
  }
  func.func @transform_2(%arg0: i32, %arg1: i32, %arg2: memref<1xi32, #tpu.memory_space<smem>>) -> (i32, i32) {
    %c0_i32 = arith.constant 0 : i32
    return %arg0, %arg1 : i32, i32
  }
}

</mosaic_0001>

<llo_original>
// kernel: tpu_custom_call.1
$region0: #{tpu_custom_call.1}
  #allocation0 [shape = 'u32[]', space=smem, size = 0x4, offset = 0x4, fixed_abs, tag = 'smem constant byte address 0x4 - core index']
  #allocation1 [shape = 'u32[144,128]{1,0:T(1,128)}', space=vmem, size = 0x12000, scoped, tag = 'internal scratch']
  #allocation2 [shape = 's32[1]{0}', space=sflag, size = 0x4, scoped, tag = 'scoped memory for tpu_custom_call.1']
  #allocation3 [shape = 's32[1]{0:T(128)S(6)}', space=smem, size = 0x200, scoped, tag = 'prefetched SMEM operand 0']
  %s0 = inlined_call_operand.<no memory space> [shape: s32[1], index: 0, kind: input, shape index: {}]
  %s1 = inlined_call_operand.hbm [shape: f32[2,256], index: 1, kind: input, shape index: {}]
  %s2 = inlined_call_operand.vmem [shape: f32[1,256], index: 2, kind: input, shape index: {}]
  %s3 = inlined_call_operand.hbm [shape: f32[2,256], index: 3, kind: output, shape index: {}]
  %s4 = sld [smem:[#allocation0]]
  $region22: #{tpu_custom_call.1} parent=0
    _
  %s6 = ssub.s32 1, %s4
  %s7 = scalar_select 0, %s6, %s4
  %8 = sst [smem:[#allocation3]] %s0
  $region1: #{tpu_custom_call.1} parent=0
    #allocation4 [shape = 'u8[2048]{0}', space=vmem, size = 0x800, scoped, tag = 'input window, operand 1, single buffered']
    #allocation5 [shape = 's32[1]{0}', space=sflag, size = 0x4, scoped, tag = 'scoped memory for tpu_custom_call.1']
    #allocation6 [shape = 's32[1]{0}', space=sflag, size = 0x4, scoped, tag = 'scoped memory for tpu_custom_call.1']
    #allocation7 [shape = 'u8[2048]{0}', space=vmem, size = 0x800, scoped, tag = 'output window, operand 0, single buffered']
    %9 = vsyncpa [#allocation5], 0
    %10 = vsyncpa [#allocation6], 0
    // Predicated region
    $region2: #{tpu_custom_call.1} parent=1 // pred_check
      _
    $region3: #{tpu_custom_call.1} parent=1 // pred_check_branch
      %12 = sbr.rel (0) target = $region5
    $region4: #{tpu_custom_call.1} parent=1 // pred_region
      %s14 = ssub.s32 64, 64
      %15 = vsyncadd [#allocation5], %s14
      %s17 = sshll.u32 [#allocation4], 4
      %s18 = int_to_ptr.vmem [resolvable:$true] %s17
      %20 = dma.hbm_to_vmem [thread:$0]  %s1, 64, %s18, [#allocation5]
    $region5: #{tpu_custom_call.1} parent=1 // pred_fallthru
      _
    // Predicated region
    $region6: #{tpu_custom_call.1} parent=1 // pred_check
      _
    $region7: #{tpu_custom_call.1} parent=1 // pred_check_branch
      %22 = sbr.rel (0) target = $region9
    $region8: #{tpu_custom_call.1} parent=1 // pred_region
      _
    $region9: #{tpu_custom_call.1} parent=1 // pred_fallthru
      _
    // Predicated region
    $region10: #{tpu_custom_call.1} parent=1 // pred_check
      _
    $region11: #{tpu_custom_call.1} parent=1 // pred_check_branch
      %24 = sbr.rel (0) target = $region13
    $region12: #{tpu_custom_call.1} parent=1 // pred_region
      %25 = dma.done [#allocation5], 64
    $region13: #{tpu_custom_call.1} parent=1 // pred_fallthru
      _
    %v26 = vld [vmem:[#allocation4] sm:$0xf]
    %v27 = vld [vmem:[%s2] sm:$0x3]
    %v29 = vlaneseq
    %v30 = vshrl.u32 %v29, 7
    %v31 = vsub.s32 0, %v30
    %v32 = vrot.slane %v27, %v31
    %v33 = vlaneseq
    %v34 = vshrl.u32 %v33, 7
    %v35 = vsub.s32 1, %v34
    %v36 = vrot.slane %v27, %v35
    %v37 = vcombine.low %v32, %v36
    %v39 = vunpack.c.l.s4 1983009808
    %v40 = vunpack.c.0.s8 %v39
    %v41 = vlaneseq
    %v42 = vshrl.u32 %v41, 7
    %v43 = vsub.s32 %v40, %v42
    %v44 = vrot.slane %v37, %v43
    %v46 = vadd.f32 %v26, %v44
    %47 = vst [vmem:[#allocation7] sm:$0xf] %v46
    // Predicated region
    $region14: #{tpu_custom_call.1} parent=1 // pred_check
      _
    $region15: #{tpu_custom_call.1} parent=1 // pred_check_branch
      %49 = sbr.rel (0) target = $region17
    $region16: #{tpu_custom_call.1} parent=1 // pred_region
      %s51 = ssub.s32 64, 64
      %52 = vsyncadd [#allocation6], %s51
      %s54 = sshll.u32 [#allocation7], 4
      %s55 = int_to_ptr.vmem [resolvable:$true] %s54
      %57 = dma.vmem_to_hbm [thread:$0]  %s55, 64, %s3, [#allocation6]
    $region17: #{tpu_custom_call.1} parent=1 // pred_fallthru
      _
    // Predicated region
    $region18: #{tpu_custom_call.1} parent=1 // pred_check
      _
    $region19: #{tpu_custom_call.1} parent=1 // pred_check_branch
      %59 = sbr.rel (0) target = $region21
    $region20: #{tpu_custom_call.1} parent=1 // pred_region
      %60 = dma.done [#allocation6], 64
    $region21: #{tpu_custom_call.1} parent=1 // pred_fallthru
      _
    %61 = vsyncpa [#allocation5], 1
    %62 = vsyncpa [#allocation6], 1

</llo_original>
